<compile_context>
chip_gen: v7x
topology: tpu7x:2x2x1
jax: 0.10.0
libtpu: 0.0.40
codegen_flags: <defaults>
</compile_context>

<pallas_src>
import math
from functools import partial

import jax
import jax.numpy as jnp
from jax.experimental import pallas as pl
from jax.experimental.pallas import tpu as pltpu


def _hann_window(n_fft):
    # torch.hann_window(n_fft) default (periodic=True)
    n = jnp.arange(n_fft, dtype=jnp.float32)
    return 0.5 - 0.5 * jnp.cos(2.0 * math.pi * n / n_fft)


# -----------------------------------------------------------------------------
# Fused Griffin-Lim kernel: all iterations for one channel in one kernel body.
# -----------------------------------------------------------------------------
def _griffin_lim_kernel(amp_ref, spec0_ref, wsyn_ref, wana_ref, invenv_ref,
                        rowsel_ref, colperm_ref, out_ref,
                        *, iters, m, m_half, T, H, R, Bp):
    """
    amp_ref     : (T, Bp)          f32   amplitude (bins zero-padded to Bp lanes)
    spec0_ref   : (T, 2*Bp)        f32   initial spectrogram [Re | Im]
    wsyn_ref    : (2*Bp, n_fft)    bf16  windowed irfft matrix (synthesis)
    wana_ref    : (n_fft, 2*Bp)    bf16  windowed rfft matrix (analysis)
    invenv_ref  : (R, H)           f32   1 / OLA(window^2), row-folded
    rowsel_ref  : (4, m_half, m+1) f32   reflect-pad row selectors
    colperm_ref : (4, H, H)        f32   reflect-pad lane permutations
    out_ref     : (T, 2*Bp)        f32   final spectrogram [Re | Im]
    """
    amp = amp_ref[...]

    def one_iteration(_, spec):
        # ---- projection onto the amplitude constraint: amp * spec/|spec|  (|spec|=0 -> amp) ----
        re, im = spec[:, :Bp], spec[:, Bp:]
        magsq = re * re + im * im
        nz = magsq > 0.0
        scale = amp * jax.lax.rsqrt(jnp.where(nz, magsq, 1.0))   # EUP rsqrt, no sqrt/divides
        proj = jnp.concatenate(
            [jnp.where(nz, re * scale, amp), jnp.where(nz, im * scale, 0.0)], axis=1)

        # ---- iSTFT: windowed irfft of every frame in ONE wide MXU matmul ----
        frames = jnp.dot(proj.astype(wsyn_ref.dtype), wsyn_ref[...],
                         preferred_element_type=jnp.float32)             # (T, n_fft)

        # ---- overlap-add into the row-folded (R, H) signal: static placement + add
        #      (no 0/1 shift-matrix matmuls) ----
        y = None
        for j in range(m):                                               # m = n_fft // hop
            chunk = frames[:, j * H:(j + 1) * H]                         # (T, H)
            pieces = []
            if j > 0:
                pieces.append(jnp.zeros((j, H), jnp.float32))
            pieces.append(chunk)
            if m - 1 - j > 0:
                pieces.append(jnp.zeros((m - 1 - j, H), jnp.float32))
            placed = jnp.concatenate(pieces, axis=0) if len(pieces) > 1 else pieces[0]
            y = placed if y is None else y + placed
        # torch.istft normalization by the overlap-added squared-window envelope
        y = y * invenv_ref[...]                                          # (R, H)

        # ---- istft center-trim + stft reflect-pad: only first/last m_half rows change ----
        top = y[:m + 1, :]                                               # (m+1, H)
        bot = y[R - (m + 1):, :]                                         # (m+1, H)
        left = (jnp.dot(jnp.dot(rowsel_ref[0], top, preferred_element_type=jnp.float32),
                        colperm_ref[0], preferred_element_type=jnp.float32)
                + jnp.dot(jnp.dot(rowsel_ref[1], top, preferred_element_type=jnp.float32),
                          colperm_ref[1], preferred_element_type=jnp.float32))
        right = (jnp.dot(jnp.dot(rowsel_ref[2], bot, preferred_element_type=jnp.float32),
                         colperm_ref[2], preferred_element_type=jnp.float32)
                 + jnp.dot(jnp.dot(rowsel_ref[3], bot, preferred_element_type=jnp.float32),
                           colperm_ref[3], preferred_element_type=jnp.float32))
        padded = jnp.concatenate([left, y[m_half:R - m_half, :], right], axis=0)   # (R, H)

        # ---- STFT: framing by static slices + windowed rfft in ONE wide MXU matmul ----
        frames_a = jnp.concatenate([padded[j:j + T, :] for j in range(m)], axis=1)  # (T, n_fft)
        return jnp.dot(frames_a.astype(wana_ref.dtype), wana_ref[...],
                       preferred_element_type=jnp.float32)               # (T, 2*Bp)

    out_ref[...] = jax.lax.fori_loop(0, iters, one_iteration, spec0_ref[...])


# -----------------------------------------------------------------------------
# Deterministic constants: window, fused DFT matrices, envelope, reflect helpers
# -----------------------------------------------------------------------------
def _build_constants(n_fft, hop, n_frames, dft_dtype=jnp.bfloat16):
    N, H, T = n_fft, hop, n_frames
    if N % H != 0 or (N // H) % 2 != 0:
        raise ValueError("this kernel requires hop_length | n_fft and n_fft/hop_length even")
    if T < 2 or (T - 1) * H <= N // 2:
        raise ValueError("reflect padding requires (n_frames-1)*hop_length > n_fft//2")
    m = N // H                         # frames overlapping any sample
    m_half = m // 2
    B = N // 2 + 1                     # onesided bins
    Bp = ((B + 127) // 128) * 128      # lane-padded bins
    R = T - 1 + m                      # rows of the row-folded (R, H) padded signal

    window = _hann_window(N)                                    # (N,)
    n = jnp.arange(N, dtype=jnp.float32)
    k = jnp.arange(B, dtype=jnp.float32)
    ang = 2.0 * math.pi * jnp.outer(k, n) / N                   # (B, N)

    # onesided irfft as matmul (norm='backward'), synthesis window folded in
    c = jnp.where((k == 0.0) | (k == N / 2.0), 1.0, 2.0)[:, None]
    mc = (c * jnp.cos(ang) / N) * window[None, :]               # (B, N)
    ms = (-c * jnp.sin(ang) / N) * window[None, :]              # (B, N)
    # onesided rfft as matmul, analysis window folded in
    wre = (jnp.cos(ang) * window[None, :]).T                    # (N, B)
    wim = (-jnp.sin(ang) * window[None, :]).T                   # (N, B)

    # fused, bin-padded DFT matrices ([Re | Im] blocks), stored bf16 (f32 accumulation)
    wsyn = jnp.zeros((2 * Bp, N), jnp.float32).at[:B].set(mc).at[Bp:Bp + B].set(ms)
    wana = jnp.zeros((N, 2 * Bp), jnp.float32).at[:, :B].set(wre).at[:, Bp:Bp + B].set(wim)
    wsyn = wsyn.astype(dft_dtype)
    wana = wana.astype(dft_dtype)

    # overlap-added squared-window envelope (torch.istft normalization), row-folded
    w2f = (window * window).reshape(m, H)
    env = jnp.zeros((R, H), jnp.float32)
    for j in range(m):
        env = env.at[j:j + T, :].add(jnp.broadcast_to(w2f[j], (T, H)))
    # TODO(synk): torch.istft's NOLA (non-zero window envelope) runtime check is not replicated.
    inv_env = jnp.where(env > 1e-11, 1.0 / jnp.maximum(env, 1e-11), 0.0)

    # tiny row-selection / lane-permutation matrices implementing "center trim + reflect pad"
    # on the first / last m_half rows of the row-folded signal:
    #   left[rk, ck]  = y[m - rk, 0]                (ck == 0)
    #                   y[m - rk - 1, H - ck]       (ck >= 1)
    #   right[rk, ck] = y[R - m_half - rk - 1, H - 2 - ck]   (ck <= H-2)
    #                   y[R - m_half - rk - 2, H - 1]        (ck == H-1)
    rk = jnp.arange(m_half)[:, None]
    src = jnp.arange(m + 1)[None, :]
    rowsel = jnp.stack([(src == (m - rk)), (src == (m - rk - 1)),
                        (src == (m_half - rk)), (src == (m_half - rk - 1))],
                       axis=0).astype(jnp.float32)              # (4, m_half, m+1)
    cs = jnp.arange(H)[:, None]
    cd = jnp.arange(H)[None, :]
    colperm = jnp.stack([(cs == 0) & (cd == 0),
                         (cd >= 1) & (cs == (H - cd)),
                         (cd <= H - 2) & (cs == (H - 2 - cd)),
                         (cs == H - 1) & (cd == H - 1)],
                        axis=0).astype(jnp.float32)             # (4, H, H)

    return dict(wsyn=wsyn, wana=wana, inv_env=inv_env, rowsel=rowsel, colperm=colperm,
                m=m, m_half=m_half, R=R, H=H, B=B, Bp=Bp)


# -----------------------------------------------------------------------------
# GriffinLim module (mirrors the PyTorch API)
# -----------------------------------------------------------------------------
class GriffinLim:
    def __init__(self, n_fft, hop_length=None, window_fn="hann"):
        if window_fn != "hann":
            raise ValueError("only the 'hann' window is supported")
        if hop_length is None:
            hop_length = n_fft // 4
        self.n_fft, self.hop_length = n_fft, hop_length

    def __call__(self, amplitude, phase=None, iteration=10, key=None):
        return self.forward(amplitude, phase=phase, iteration=iteration, key=key)

    def forward(self, amplitude, phase=None, iteration=10, key=None):
        N, H = self.n_fft, self.hop_length
        B = N // 2 + 1
        amplitude = jnp.asarray(amplitude, jnp.float32)
        n_dims = amplitude.ndim
        if n_dims == 2:
            lead, amp3 = None, amplitude[None]
        elif n_dims > 2:
            lead = amplitude.shape[:-2]
            amp3 = amplitude.reshape((-1,) + amplitude.shape[-2:])
        else:
            raise ValueError("Invalid shape of tensor.")
        C, nb, T = amp3.shape
        if nb != B:
            raise ValueError(f"expected n_bins == n_fft//2+1 == {B}, got {nb}")

        if phase is None:
            # torch.distributions.Uniform(0, 2*pi).sample(...) -> deterministic jax.random.uniform
            if key is None:
                key = jax.random.PRNGKey(0)
            phase3 = jax.random.uniform(key, amp3.shape, jnp.float32,
                                        minval=0.0, maxval=2.0 * math.pi)
        else:
            phase3 = jnp.asarray(phase, jnp.float32).reshape(amp3.shape)

        cst = _build_constants(N, H, T)
        m, m_half, R, Bp = cst["m"], cst["m_half"], cst["R"], cst["Bp"]

        # internal layout: frames on sublanes, bins on (padded) lanes, [Re | Im] fused
        pad = [(0, 0), (0, 0), (0, Bp - B)]
        amp_p = jnp.pad(jnp.transpose(amp3, (0, 2, 1)), pad)                 # (C, T, Bp)
        ph_t = jnp.transpose(phase3, (0, 2, 1))
        spec0 = jnp.concatenate([jnp.pad(jnp.cos(ph_t), pad),
                                 jnp.pad(jnp.sin(ph_t), pad)], axis=-1)      # (C, T, 2*Bp)

        kernel = partial(_griffin_lim_kernel, iters=int(iteration), m=m, m_half=m_half,
                         T=T, H=H, R=R, Bp=Bp)
        # TODO(synk): for very large n_fft / n_frames, tile the frame axis / bin axis and set
        #             vmem_limit_bytes explicitly (v7x 64 MiB budget); not needed at these sizes.
        spec_out = pl.pallas_call(
            kernel,
            grid=(C,),
            in_specs=[
                pl.BlockSpec((None, T, Bp), lambda c: (c, 0, 0)),
                pl.BlockSpec((None, T, 2 * Bp), lambda c: (c, 0, 0)),
                pl.BlockSpec((2 * Bp, N), lambda c: (0, 0)),
                pl.BlockSpec((N, 2 * Bp), lambda c: (0, 0)),
                pl.BlockSpec((R, H), lambda c: (0, 0)),
                pl.BlockSpec((4, m_half, m + 1), lambda c: (0, 0, 0)),
                pl.BlockSpec((4, H, H), lambda c: (0, 0, 0)),
            ],
            out_specs=pl.BlockSpec((None, T, 2 * Bp), lambda c: (c, 0, 0)),
            out_shape=jax.ShapeDtypeStruct((C, T, 2 * Bp), jnp.float32),
            compiler_params=pltpu.CompilerParams(dimension_semantics=("parallel",)),
        )(amp_p, spec0, cst["wsyn"], cst["wana"], cst["inv_env"],
          cst["rowsel"], cst["colperm"])

        re = spec_out[..., :B]
        im = spec_out[..., Bp:Bp + B]
        phase_out = jnp.transpose(jnp.arctan2(im, re), (0, 2, 1))            # (C, B, T)
        return phase_out[0] if n_dims == 2 else phase_out.reshape(lead + (B, T))


if __name__ == "__main__":
    n_fft = 32
    hop_length = 8                       # == n_fft // 4 (the module default)
    n_bins = n_fft // 2 + 1              # 17
    n_frames = 8

    key = jax.random.PRNGKey(0)
    k_amp, k_phase = jax.random.split(key)
    amplitude = jax.random.uniform(k_amp, (n_bins, n_frames), jnp.float32,
                                   minval=0.1, maxval=1.0)

    gl = GriffinLim(n_fft, hop_length=hop_length)
    phase = gl(amplitude, phase=None, iteration=10, key=k_phase)
    phase = jax.block_until_ready(phase)

    assert phase.shape == (n_bins, n_frames), phase.shape
    assert phase.dtype == jnp.float32
    assert bool(jnp.all(jnp.isfinite(phase)))
    assert bool(jnp.all(jnp.abs(phase) <= math.pi + 1e-5))
    print("KERNEL_OK")
</pallas_src>

<mosaic_0001>
module attributes {stable_mosaic.version = 11 : i64} {
  func.func @_griffin_lim_kernel(%arg0: i32, %arg1: memref<1x8x128xf32, #tpu.memory_space<vmem>>, %arg2: memref<1x8x256xf32, #tpu.memory_space<vmem>>, %arg3: memref<256x32xbf16, #tpu.memory_space<vmem>>, %arg4: memref<32x256xbf16, #tpu.memory_space<vmem>>, %arg5: memref<11x8xf32, #tpu.memory_space<vmem>>, %arg6: memref<4x2x5xf32, #tpu.memory_space<vmem>>, %arg7: memref<4x8x8xf32, #tpu.memory_space<vmem>>, %arg8: memref<1x8x256xf32, #tpu.memory_space<vmem>>) attributes {dimension_semantics = [#tpu.dimension_semantics<parallel>], iteration_bounds = array<i64: 1>, scalar_prefetch = 0 : i64, scratch_operands = 0 : i64, tpu.core_type = #tpu.core_type<tc>, window_params = [{transform_indices = @transform_0, window_bounds = array<i64: 1, 8, 128>}, {transform_indices = @transform_1, window_bounds = array<i64: 1, 8, 256>}, {pipeline_mode = #tpu.pipeline_mode<synchronous>, transform_indices = @transform_2, window_bounds = array<i64: 256, 32>}, {pipeline_mode = #tpu.pipeline_mode<synchronous>, transform_indices = @transform_3, window_bounds = array<i64: 32, 256>}, {pipeline_mode = #tpu.pipeline_mode<synchronous>, transform_indices = @transform_4, window_bounds = array<i64: 11, 8>}, {pipeline_mode = #tpu.pipeline_mode<synchronous>, transform_indices = @transform_5, window_bounds = array<i64: 4, 2, 5>}, {pipeline_mode = #tpu.pipeline_mode<synchronous>, transform_indices = @transform_6, window_bounds = array<i64: 4, 8, 8>}, {transform_indices = @transform_7, window_bounds = array<i64: 1, 8, 256>}]} {
    %c0 = arith.constant 0 : index
    %c0_0 = arith.constant 0 : index
    %c0_1 = arith.constant 0 : index
    %0 = vector.load %arg1[%c0, %c0_0, %c0_1] : memref<1x8x128xf32, #tpu.memory_space<vmem>>, vector<1x8x128xf32>
    %1 = vector.shape_cast %0 : vector<1x8x128xf32> to vector<8x128xf32>
    %c0_2 = arith.constant 0 : index
    %c0_3 = arith.constant 0 : index
    %c0_4 = arith.constant 0 : index
    %2 = vector.load %arg2[%c0_2, %c0_3, %c0_4] : memref<1x8x256xf32, #tpu.memory_space<vmem>>, vector<1x8x256xf32>
    %3 = vector.shape_cast %2 : vector<1x8x256xf32> to vector<8x256xf32>
    %c0_i32 = arith.constant 0 : i32
    %c10_i32 = arith.constant 10 : i32
    %4 = arith.addi %c0_i32, %c10_i32 : i32
    %c1_i32 = arith.constant 1 : i32
    %5 = scf.for %arg9 = %c0_i32 to %4 step %c1_i32 iter_args(%arg10 = %3) -> (vector<8x256xf32>)  : i32 {
      %9 = vector.extract_strided_slice %arg10 {offsets = [0, 0], sizes = [8, 128], strides = [1, 1]} : vector<8x256xf32> to vector<8x128xf32>
      %10 = vector.extract_strided_slice %arg10 {offsets = [0, 128], sizes = [8, 128], strides = [1, 1]} : vector<8x256xf32> to vector<8x128xf32>
      %11 = arith.mulf %9, %9 : vector<8x128xf32>
      %12 = arith.mulf %10, %10 : vector<8x128xf32>
      %13 = arith.addf %11, %12 : vector<8x128xf32>
      %cst = arith.constant 0.000000e+00 : f32
      %14 = vector.broadcast %cst : f32 to vector<8x128xf32>
      %15 = arith.cmpf ogt, %13, %14 : vector<8x128xf32>
      %cst_8 = arith.constant 1.000000e+00 : f32
      %16 = vector.broadcast %cst_8 : f32 to vector<8x128xf32>
      %17 = arith.select %15, %13, %16 : vector<8x128xi1>, vector<8x128xf32>
      %18 = math.rsqrt %17 : vector<8x128xf32>
      %19 = arith.mulf %1, %18 : vector<8x128xf32>
      %20 = arith.mulf %9, %19 : vector<8x128xf32>
      %21 = arith.select %15, %20, %1 : vector<8x128xi1>, vector<8x128xf32>
      %22 = arith.mulf %10, %19 : vector<8x128xf32>
      %cst_9 = arith.constant 0.000000e+00 : f32
      %23 = vector.broadcast %cst_9 : f32 to vector<8x128xf32>
      %24 = arith.select %15, %22, %23 : vector<8x128xi1>, vector<8x128xf32>
      %25 = tpu.concatenate %21, %24 in 1 : vector<8x128xf32>, vector<8x128xf32> -> vector<8x256xf32>
      %26 = arith.truncf %25 : vector<8x256xf32> to vector<8x256xbf16>
      %c0_10 = arith.constant 0 : index
      %c0_11 = arith.constant 0 : index
      %27 = vector.load %arg3[%c0_10, %c0_11] : memref<256x32xbf16, #tpu.memory_space<vmem>>, vector<256x32xbf16>
      %cst_12 = arith.constant dense<0.000000e+00> : vector<8x32xf32>
      %28 = tpu.matmul %26, %27, %cst_12 {dimension_numbers = #tpu.dot_dimension_numbers<[1], [0], [0], [1], [0, 0, 1, 1], [], []>} : vector<8x256xbf16>, vector<256x32xbf16>, vector<8x32xf32> -> vector<8x32xf32>
      %29 = vector.extract_strided_slice %28 {offsets = [0, 0], sizes = [8, 8], strides = [1, 1]} : vector<8x32xf32> to vector<8x8xf32>
      %cst_13 = arith.constant 0.000000e+00 : f32
      %30 = vector.broadcast %cst_13 : f32 to vector<3x8xf32>
      %31 = tpu.concatenate %29, %30 in 0 : vector<8x8xf32>, vector<3x8xf32> -> vector<11x8xf32>
      %32 = vector.extract_strided_slice %28 {offsets = [0, 8], sizes = [8, 8], strides = [1, 1]} : vector<8x32xf32> to vector<8x8xf32>
      %cst_14 = arith.constant 0.000000e+00 : f32
      %33 = vector.broadcast %cst_14 : f32 to vector<1x8xf32>
      %cst_15 = arith.constant 0.000000e+00 : f32
      %34 = vector.broadcast %cst_15 : f32 to vector<2x8xf32>
      %35 = tpu.concatenate %33, %32, %34 in 0 : vector<1x8xf32>, vector<8x8xf32>, vector<2x8xf32> -> vector<11x8xf32>
      %36 = arith.addf %31, %35 : vector<11x8xf32>
      %37 = vector.extract_strided_slice %28 {offsets = [0, 16], sizes = [8, 8], strides = [1, 1]} : vector<8x32xf32> to vector<8x8xf32>
      %cst_16 = arith.constant 0.000000e+00 : f32
      %38 = vector.broadcast %cst_16 : f32 to vector<2x8xf32>
      %cst_17 = arith.constant 0.000000e+00 : f32
      %39 = vector.broadcast %cst_17 : f32 to vector<1x8xf32>
      %40 = tpu.concatenate %38, %37, %39 in 0 : vector<2x8xf32>, vector<8x8xf32>, vector<1x8xf32> -> vector<11x8xf32>
      %41 = arith.addf %36, %40 : vector<11x8xf32>
      %42 = vector.extract_strided_slice %28 {offsets = [0, 24], sizes = [8, 8], strides = [1, 1]} : vector<8x32xf32> to vector<8x8xf32>
      %cst_18 = arith.constant 0.000000e+00 : f32
      %43 = vector.broadcast %cst_18 : f32 to vector<3x8xf32>
      %44 = tpu.concatenate %43, %42 in 0 : vector<3x8xf32>, vector<8x8xf32> -> vector<11x8xf32>
      %45 = arith.addf %41, %44 : vector<11x8xf32>
      %c0_19 = arith.constant 0 : index
      %c0_20 = arith.constant 0 : index
      %46 = vector.load %arg5[%c0_19, %c0_20] : memref<11x8xf32, #tpu.memory_space<vmem>>, vector<11x8xf32>
      %47 = arith.mulf %45, %46 : vector<11x8xf32>
      %48 = vector.extract_strided_slice %47 {offsets = [0, 0], sizes = [5, 8], strides = [1, 1]} : vector<11x8xf32> to vector<5x8xf32>
      %49 = vector.extract_strided_slice %47 {offsets = [6, 0], sizes = [5, 8], strides = [1, 1]} : vector<11x8xf32> to vector<5x8xf32>
      %c0_21 = arith.constant 0 : index
      %c0_22 = arith.constant 0 : index
      %c0_23 = arith.constant 0 : index
      %50 = vector.load %arg6[%c0_21, %c0_22, %c0_23] : memref<4x2x5xf32, #tpu.memory_space<vmem>>, vector<1x2x5xf32>
      %51 = vector.shape_cast %50 : vector<1x2x5xf32> to vector<2x5xf32>
      %cst_24 = arith.constant dense<0.000000e+00> : vector<2x8xf32>
      %52 = tpu.matmul %51, %48, %cst_24 {dimension_numbers = #tpu.dot_dimension_numbers<[1], [0], [0], [1], [0, 0, 1, 1], [], []>} : vector<2x5xf32>, vector<5x8xf32>, vector<2x8xf32> -> vector<2x8xf32>
      %c0_25 = arith.constant 0 : index
      %c0_26 = arith.constant 0 : index
      %c0_27 = arith.constant 0 : index
      %53 = vector.load %arg7[%c0_25, %c0_26, %c0_27] : memref<4x8x8xf32, #tpu.memory_space<vmem>>, vector<1x8x8xf32>
      %54 = vector.shape_cast %53 : vector<1x8x8xf32> to vector<8x8xf32>
      %cst_28 = arith.constant dense<0.000000e+00> : vector<2x8xf32>
      %55 = tpu.matmul %52, %54, %cst_28 {dimension_numbers = #tpu.dot_dimension_numbers<[1], [0], [0], [1], [0, 0, 1, 1], [], []>} : vector<2x8xf32>, vector<8x8xf32>, vector<2x8xf32> -> vector<2x8xf32>
      %c1 = arith.constant 1 : index
      %c0_29 = arith.constant 0 : index
      %c0_30 = arith.constant 0 : index
      %56 = vector.load %arg6[%c1, %c0_29, %c0_30] : memref<4x2x5xf32, #tpu.memory_space<vmem>>, vector<1x2x5xf32>
      %57 = vector.shape_cast %56 : vector<1x2x5xf32> to vector<2x5xf32>
      %cst_31 = arith.constant dense<0.000000e+00> : vector<2x8xf32>
      %58 = tpu.matmul %57, %48, %cst_31 {dimension_numbers = #tpu.dot_dimension_numbers<[1], [0], [0], [1], [0, 0, 1, 1], [], []>} : vector<2x5xf32>, vector<5x8xf32>, vector<2x8xf32> -> vector<2x8xf32>
      %c1_32 = arith.constant 1 : index
      %c0_33 = arith.constant 0 : index
      %c0_34 = arith.constant 0 : index
      %59 = vector.load %arg7[%c1_32, %c0_33, %c0_34] : memref<4x8x8xf32, #tpu.memory_space<vmem>>, vector<1x8x8xf32>
      %60 = vector.shape_cast %59 : vector<1x8x8xf32> to vector<8x8xf32>
      %cst_35 = arith.constant dense<0.000000e+00> : vector<2x8xf32>
      %61 = tpu.matmul %58, %60, %cst_35 {dimension_numbers = #tpu.dot_dimension_numbers<[1], [0], [0], [1], [0, 0, 1, 1], [], []>} : vector<2x8xf32>, vector<8x8xf32>, vector<2x8xf32> -> vector<2x8xf32>
      %62 = arith.addf %55, %61 : vector<2x8xf32>
      %c2 = arith.constant 2 : index
      %c0_36 = arith.constant 0 : index
      %c0_37 = arith.constant 0 : index
      %63 = vector.load %arg6[%c2, %c0_36, %c0_37] : memref<4x2x5xf32, #tpu.memory_space<vmem>>, vector<1x2x5xf32>
      %64 = vector.shape_cast %63 : vector<1x2x5xf32> to vector<2x5xf32>
      %cst_38 = arith.constant dense<0.000000e+00> : vector<2x8xf32>
      %65 = tpu.matmul %64, %49, %cst_38 {dimension_numbers = #tpu.dot_dimension_numbers<[1], [0], [0], [1], [0, 0, 1, 1], [], []>} : vector<2x5xf32>, vector<5x8xf32>, vector<2x8xf32> -> vector<2x8xf32>
      %c2_39 = arith.constant 2 : index
      %c0_40 = arith.constant 0 : index
      %c0_41 = arith.constant 0 : index
      %66 = vector.load %arg7[%c2_39, %c0_40, %c0_41] : memref<4x8x8xf32, #tpu.memory_space<vmem>>, vector<1x8x8xf32>
      %67 = vector.shape_cast %66 : vector<1x8x8xf32> to vector<8x8xf32>
      %cst_42 = arith.constant dense<0.000000e+00> : vector<2x8xf32>
      %68 = tpu.matmul %65, %67, %cst_42 {dimension_numbers = #tpu.dot_dimension_numbers<[1], [0], [0], [1], [0, 0, 1, 1], [], []>} : vector<2x8xf32>, vector<8x8xf32>, vector<2x8xf32> -> vector<2x8xf32>
      %c3 = arith.constant 3 : index
      %c0_43 = arith.constant 0 : index
      %c0_44 = arith.constant 0 : index
      %69 = vector.load %arg6[%c3, %c0_43, %c0_44] : memref<4x2x5xf32, #tpu.memory_space<vmem>>, vector<1x2x5xf32>
      %70 = vector.shape_cast %69 : vector<1x2x5xf32> to vector<2x5xf32>
      %cst_45 = arith.constant dense<0.000000e+00> : vector<2x8xf32>
      %71 = tpu.matmul %70, %49, %cst_45 {dimension_numbers = #tpu.dot_dimension_numbers<[1], [0], [0], [1], [0, 0, 1, 1], [], []>} : vector<2x5xf32>, vector<5x8xf32>, vector<2x8xf32> -> vector<2x8xf32>
      %c3_46 = arith.constant 3 : index
      %c0_47 = arith.constant 0 : index
      %c0_48 = arith.constant 0 : index
      %72 = vector.load %arg7[%c3_46, %c0_47, %c0_48] : memref<4x8x8xf32, #tpu.memory_space<vmem>>, vector<1x8x8xf32>
      %73 = vector.shape_cast %72 : vector<1x8x8xf32> to vector<8x8xf32>
      %cst_49 = arith.constant dense<0.000000e+00> : vector<2x8xf32>
      %74 = tpu.matmul %71, %73, %cst_49 {dimension_numbers = #tpu.dot_dimension_numbers<[1], [0], [0], [1], [0, 0, 1, 1], [], []>} : vector<2x8xf32>, vector<8x8xf32>, vector<2x8xf32> -> vector<2x8xf32>
      %75 = arith.addf %68, %74 : vector<2x8xf32>
      %76 = vector.extract_strided_slice %47 {offsets = [2, 0], sizes = [7, 8], strides = [1, 1]} : vector<11x8xf32> to vector<7x8xf32>
      %77 = tpu.concatenate %62, %76, %75 in 0 : vector<2x8xf32>, vector<7x8xf32>, vector<2x8xf32> -> vector<11x8xf32>
      %78 = vector.extract_strided_slice %77 {offsets = [0, 0], sizes = [8, 8], strides = [1, 1]} : vector<11x8xf32> to vector<8x8xf32>
      %79 = vector.extract_strided_slice %77 {offsets = [1, 0], sizes = [8, 8], strides = [1, 1]} : vector<11x8xf32> to vector<8x8xf32>
      %80 = vector.extract_strided_slice %77 {offsets = [2, 0], sizes = [8, 8], strides = [1, 1]} : vector<11x8xf32> to vector<8x8xf32>
      %81 = vector.extract_strided_slice %77 {offsets = [3, 0], sizes = [8, 8], strides = [1, 1]} : vector<11x8xf32> to vector<8x8xf32>
      %82 = tpu.concatenate %78, %79, %80, %81 in 1 : vector<8x8xf32>, vector<8x8xf32>, vector<8x8xf32>, vector<8x8xf32> -> vector<8x32xf32>
      %83 = arith.truncf %82 : vector<8x32xf32> to vector<8x32xbf16>
      %c0_50 = arith.constant 0 : index
      %c0_51 = arith.constant 0 : index
      %84 = vector.load %arg4[%c0_50, %c0_51] : memref<32x256xbf16, #tpu.memory_space<vmem>>, vector<32x256xbf16>
      %cst_52 = arith.constant dense<0.000000e+00> : vector<8x256xf32>
      %85 = tpu.matmul %83, %84, %cst_52 {dimension_numbers = #tpu.dot_dimension_numbers<[1], [0], [0], [1], [0, 0, 1, 1], [], []>} : vector<8x32xbf16>, vector<32x256xbf16>, vector<8x256xf32> -> vector<8x256xf32>
      scf.yield %85 : vector<8x256xf32>
    }
    %c0_5 = arith.constant 0 : index
    %c0_6 = arith.constant 0 : index
    %c0_7 = arith.constant 0 : index
    %6 = vector.load %arg8[%c0_5, %c0_6, %c0_7] : memref<1x8x256xf32, #tpu.memory_space<vmem>>, vector<1x8x256xf32>
    %7 = vector.shape_cast %6 : vector<1x8x256xf32> to vector<8x256xf32>
    %8 = vector.shape_cast %5 : vector<8x256xf32> to vector<1x8x256xf32>
    tpu.vector_store %arg8[%c0_5, %c0_6, %c0_7], %8 {strides = array<i32>} : memref<1x8x256xf32, #tpu.memory_space<vmem>>, vector<1x8x256xf32>,
    return
  }
  func.func @transform_0(%arg0: i32) -> (i32, i32, i32) {
    %c0_i32 = arith.constant 0 : i32
    %c0_i32_0 = arith.constant 0 : i32
    %c0_i32_1 = arith.constant 0 : i32
    return %arg0, %c0_i32, %c0_i32_0 : i32, i32, i32
  }
  func.func @transform_1(%arg0: i32) -> (i32, i32, i32) {
    %c0_i32 = arith.constant 0 : i32
    %c0_i32_0 = arith.constant 0 : i32
    %c0_i32_1 = arith.constant 0 : i32
    return %arg0, %c0_i32, %c0_i32_0 : i32, i32, i32
  }
  func.func @transform_2(%arg0: i32) -> (i32, i32) {
    %c0_i32 = arith.constant 0 : i32
    %c0_i32_0 = arith.constant 0 : i32
    %c0_i32_1 = arith.constant 0 : i32
    return %c0_i32, %c0_i32_0 : i32, i32
  }
  func.func @transform_3(%arg0: i32) -> (i32, i32) {
    %c0_i32 = arith.constant 0 : i32
    %c0_i32_0 = arith.constant 0 : i32
    %c0_i32_1 = arith.constant 0 : i32
    return %c0_i32, %c0_i32_0 : i32, i32
  }
  func.func @transform_4(%arg0: i32) -> (i32, i32) {
    %c0_i32 = arith.constant 0 : i32
    %c0_i32_0 = arith.constant 0 : i32
    %c0_i32_1 = arith.constant 0 : i32
    return %c0_i32, %c0_i32_0 : i32, i32
  }
  func.func @transform_5(%arg0: i32) -> (i32, i32, i32) {
    %c0_i32 = arith.constant 0 : i32
    %c0_i32_0 = arith.constant 0 : i32
    %c0_i32_1 = arith.constant 0 : i32
    %c0_i32_2 = arith.constant 0 : i32
    return %c0_i32, %c0_i32_0, %c0_i32_1 : i32, i32, i32
  }
  func.func @transform_6(%arg0: i32) -> (i32, i32, i32) {
    %c0_i32 = arith.constant 0 : i32
    %c0_i32_0 = arith.constant 0 : i32
    %c0_i32_1 = arith.constant 0 : i32
    %c0_i32_2 = arith.constant 0 : i32
    return %c0_i32, %c0_i32_0, %c0_i32_1 : i32, i32, i32
  }
  func.func @transform_7(%arg0: i32) -> (i32, i32, i32) {
    %c0_i32 = arith.constant 0 : i32
    %c0_i32_0 = arith.constant 0 : i32
    %c0_i32_1 = arith.constant 0 : i32
    return %arg0, %c0_i32, %c0_i32_0 : i32, i32, i32
  }
}

</mosaic_0001>

<llo_original>
// kernel: tpu_custom_call.1
$region0: #{tpu_custom_call.1}
  #allocation0 [shape = 'u32[]', space=smem, size = 0x4, offset = 0x4, fixed_abs, tag = 'smem constant byte address 0x4 - core index']
  #allocation1 [shape = 'u32[144,128]{1,0:T(1,128)}', space=vmem, size = 0x12000, scoped, tag = 'internal scratch']
  %s0 = inlined_call_operand.vmem [shape: f32[1,8,128], index: 0, kind: input, shape index: {}]
  %s1 = inlined_call_operand.vmem [shape: f32[1,8,256], index: 1, kind: input, shape index: {}]
  %s2 = inlined_call_operand.vmem [shape: bf16[256,32], index: 2, kind: input, shape index: {}]
  %s3 = inlined_call_operand.vmem [shape: bf16[32,256], index: 3, kind: input, shape index: {}]
  %s4 = inlined_call_operand.vmem [shape: f32[11,8], index: 4, kind: input, shape index: {}]
  %s5 = inlined_call_operand.vmem [shape: f32[4,2,5], index: 5, kind: input, shape index: {}]
  %s6 = inlined_call_operand.vmem [shape: f32[4,8,8], index: 6, kind: input, shape index: {}]
  %s7 = inlined_call_operand.hbm [shape: f32[1,8,256], index: 7, kind: output, shape index: {}]
  %s8 = sld [smem:[#allocation0]]
  $region45: #{tpu_custom_call.1} parent=0
    _
  %s10 = ssub.s32 1, %s8
  %s11 = scalar_select 0, %s10, %s8
  $region1: #{tpu_custom_call.1} parent=0
    #allocation2 [shape = 'u8[8192]{0}', space=vmem, size = 0x2000, scoped, tag = 'output window, operand 0, single buffered']
    #allocation3 [shape = 's32[1]{0}', space=sflag, size = 0x4, scoped, tag = 'scoped memory for tpu_custom_call.1']
    %12 = vsyncpa [#allocation3], 0
    // Predicated region
    $region2: #{tpu_custom_call.1} parent=1 // pred_check
      _
    $region3: #{tpu_custom_call.1} parent=1 // pred_check_branch
      %14 = sbr.rel (0) target = $region5
    $region4: #{tpu_custom_call.1} parent=1 // pred_region
      _
    $region5: #{tpu_custom_call.1} parent=1 // pred_fallthru
      _
    // Predicated region
    $region6: #{tpu_custom_call.1} parent=1 // pred_check
      _
    $region7: #{tpu_custom_call.1} parent=1 // pred_check_branch
      %16 = sbr.rel (0) target = $region9
    $region8: #{tpu_custom_call.1} parent=1 // pred_region
      _
    $region9: #{tpu_custom_call.1} parent=1 // pred_fallthru
      _
    // Predicated region
    $region10: #{tpu_custom_call.1} parent=1 // pred_check
      _
    $region11: #{tpu_custom_call.1} parent=1 // pred_check_branch
      %18 = sbr.rel (0) target = $region13
    $region12: #{tpu_custom_call.1} parent=1 // pred_region
      _
    $region13: #{tpu_custom_call.1} parent=1 // pred_fallthru
      _
    // Predicated region
    $region14: #{tpu_custom_call.1} parent=1 // pred_check
      _
    $region15: #{tpu_custom_call.1} parent=1 // pred_check_branch
      %20 = sbr.rel (0) target = $region17
    $region16: #{tpu_custom_call.1} parent=1 // pred_region
      _
    $region17: #{tpu_custom_call.1} parent=1 // pred_fallthru
      _
    // Predicated region
    $region18: #{tpu_custom_call.1} parent=1 // pred_check
      _
    $region19: #{tpu_custom_call.1} parent=1 // pred_check_branch
      %22 = sbr.rel (0) target = $region21
    $region20: #{tpu_custom_call.1} parent=1 // pred_region
      _
    $region21: #{tpu_custom_call.1} parent=1 // pred_fallthru
      _
    // Predicated region
    $region22: #{tpu_custom_call.1} parent=1 // pred_check
      _
    $region23: #{tpu_custom_call.1} parent=1 // pred_check_branch
      %24 = sbr.rel (0) target = $region25
    $region24: #{tpu_custom_call.1} parent=1 // pred_region
      _
    $region25: #{tpu_custom_call.1} parent=1 // pred_fallthru
      _
    // Predicated region
    $region26: #{tpu_custom_call.1} parent=1 // pred_check
      _
    $region27: #{tpu_custom_call.1} parent=1 // pred_check_branch
      %26 = sbr.rel (0) target = $region29
    $region28: #{tpu_custom_call.1} parent=1 // pred_region
      _
    $region29: #{tpu_custom_call.1} parent=1 // pred_fallthru
      _
    %v28 = vld [vmem:[%s0] sm:$0xff]
    %v29 = vld [vmem:[%s1] sm:$0xff]
    %v30 = vld [vmem:[%s1 + $0x8] sm:$0xff]
    loop: start=0, step=1, limit=10
    $region30: #{tpu_custom_call.1} parent=1 // loop_pre_header
      _
    $region31: #{tpu_custom_call.1} parent=1 // loop_header
      %s32 = sphi 0, %s36
      %p33 = scmp.ge.s32.totalorder %s32, 10
      %v37 = vphi %v29, %v957
      %v38 = vphi %v30, %v959
    $region32: #{tpu_custom_call.1} parent=1 // loop_header_branch
      %35 = sbr.rel (%p33) target = $region36
    $region33: #{tpu_custom_call.1} parent=1 // loop_body
      %v39 = vmul.f32 %v37, %v37
      %v40 = vmul.f32 %v38, %v38
      %v41 = vadd.f32 %v39, %v40
      %vm42 = vcmp.gt.f32.partialorder %v41, 0.0
      %v43 = vsel %vm42, %v41, 1.0
      %v44 = vrsqrt.pop %v43
      %v45 = vmul.f32 %v28, %v44
      %v46 = vmul.f32 %v37, %v45
      %v47 = vsel %vm42, %v46, %v28
      %v48 = vmul.f32 %v38, %v45
      %v49 = vsel %vm42, %v48, 0.0
      %v50 = vpack.c.bf16 %v47, %v47
      %v51 = vpack.c.bf16 %v49, %v49
      %v52 = vld [vmem:[%s2] sm:$0xf]
      %v53 = vld [vmem:[%s2 + $0x4] sm:$0xf]
      %v54 = vld [vmem:[%s2 + $0x8] sm:$0xf]
      %v55 = vld [vmem:[%s2 + $0xc] sm:$0xf]
      %v56 = vld [vmem:[%s2 + $0x10] sm:$0xf]
      %v57 = vld [vmem:[%s2 + $0x14] sm:$0xf]
      %v58 = vld [vmem:[%s2 + $0x18] sm:$0xf]
      %v59 = vld [vmem:[%s2 + $0x1c] sm:$0xf]
      %v60 = vld [vmem:[%s2 + $0x20] sm:$0xf]
      %v61 = vld [vmem:[%s2 + $0x24] sm:$0xf]
      %v62 = vld [vmem:[%s2 + $0x28] sm:$0xf]
      %v63 = vld [vmem:[%s2 + $0x2c] sm:$0xf]
      %v64 = vld [vmem:[%s2 + $0x30] sm:$0xf]
      %v65 = vld [vmem:[%s2 + $0x34] sm:$0xf]
      %v66 = vld [vmem:[%s2 + $0x38] sm:$0xf]
      %v67 = vld [vmem:[%s2 + $0x3c] sm:$0xf]
      %v68 = vld [vmem:[%s2 + $0x40] sm:$0xf]
      %v69 = vld [vmem:[%s2 + $0x44] sm:$0xf]
      %v70 = vld [vmem:[%s2 + $0x48] sm:$0xf]
      %v71 = vld [vmem:[%s2 + $0x4c] sm:$0xf]
      %v72 = vld [vmem:[%s2 + $0x50] sm:$0xf]
      %v73 = vld [vmem:[%s2 + $0x54] sm:$0xf]
      %v74 = vld [vmem:[%s2 + $0x58] sm:$0xf]
      %v75 = vld [vmem:[%s2 + $0x5c] sm:$0xf]
      %v76 = vld [vmem:[%s2 + $0x60] sm:$0xf]
      %v77 = vld [vmem:[%s2 + $0x64] sm:$0xf]
      %v78 = vld [vmem:[%s2 + $0x68] sm:$0xf]
      %v79 = vld [vmem:[%s2 + $0x6c] sm:$0xf]
      %v80 = vld [vmem:[%s2 + $0x70] sm:$0xf]
      %v81 = vld [vmem:[%s2 + $0x74] sm:$0xf]
      %v82 = vld [vmem:[%s2 + $0x78] sm:$0xf]
      %v83 = vld [vmem:[%s2 + $0x7c] sm:$0xf]
      %v116 = vunpack.c.l.b16 %v52
      %v117 = vunpack.c.l.b16 %v53
      %v118 = vunpack.c.l.b16 %v54
      %v119 = vunpack.c.l.b16 %v55
      %v120 = vunpack.c.l.b16 %v56
      %v121 = vunpack.c.l.b16 %v57
      %v122 = vunpack.c.l.b16 %v58
      %v123 = vunpack.c.l.b16 %v59
      %v124 = vunpack.c.l.b16 %v60
      %v125 = vunpack.c.l.b16 %v61
      %v126 = vunpack.c.l.b16 %v62
      %v127 = vunpack.c.l.b16 %v63
      %v128 = vunpack.c.l.b16 %v64
      %v129 = vunpack.c.l.b16 %v65
      %v130 = vunpack.c.l.b16 %v66
      %v131 = vunpack.c.l.b16 %v67
      %v132 = vunpack.c.l.b16 %v68
      %v133 = vunpack.c.l.b16 %v69
      %v134 = vunpack.c.l.b16 %v70
      %v135 = vunpack.c.l.b16 %v71
      %v136 = vunpack.c.l.b16 %v72
      %v137 = vunpack.c.l.b16 %v73
      %v138 = vunpack.c.l.b16 %v74
      %v139 = vunpack.c.l.b16 %v75
      %v140 = vunpack.c.l.b16 %v76
      %v141 = vunpack.c.l.b16 %v77
      %v142 = vunpack.c.l.b16 %v78
      %v143 = vunpack.c.l.b16 %v79
      %v144 = vunpack.c.l.b16 %v80
      %v145 = vunpack.c.l.b16 %v81
      %v146 = vunpack.c.l.b16 %v82
      %v147 = vunpack.c.l.b16 %v83
      %v148 = vpack.c.b16 %v117, %v116
      %v149 = vpack.c.b16 %v119, %v118
      %v150 = vpack.c.b16 %v121, %v120
      %v151 = vpack.c.b16 %v123, %v122
      %v152 = vpack.c.b16 %v125, %v124
      %v153 = vpack.c.b16 %v127, %v126
      %v154 = vpack.c.b16 %v129, %v128
      %v155 = vpack.c.b16 %v131, %v130
      %v156 = vpack.c.b16 %v133, %v132
      %v157 = vpack.c.b16 %v135, %v134
      %v158 = vpack.c.b16 %v137, %v136
      %v159 = vpack.c.b16 %v139, %v138
      %v160 = vpack.c.b16 %v141, %v140
      %v161 = vpack.c.b16 %v143, %v142
      %v162 = vpack.c.b16 %v145, %v144
      %v163 = vpack.c.b16 %v147, %v146
      %180 = vmatprep.subr.bf16.mxu0 0
      %181 = vmatpush1.bf16.msra.mxu0 %v148
      %182 = vmatprep.subr.bf16.mxu0 0
      %183 = vmatpush1.bf16.msra.mxu0 %v149
      %184 = vmatprep.subr.bf16.mxu0 0
      %185 = vmatpush1.bf16.msra.mxu0 %v150
      %186 = vmatprep.subr.bf16.mxu0 0
      %187 = vmatpush1.bf16.msra.mxu0 %v151
      %188 = vmatprep.subr.bf16.mxu0 0
      %189 = vmatpush1.bf16.msra.mxu0 %v152
      %190 = vmatprep.subr.bf16.mxu0 0
      %191 = vmatpush1.bf16.msra.mxu0 %v153
      %192 = vmatprep.subr.bf16.mxu0 0
      %193 = vmatpush1.bf16.msra.mxu0 %v154
      %194 = vmatprep.subr.bf16.mxu0 0
      %195 = vmatpush1.bf16.msra.mxu0 %v155
      %196 = vmatprep.subr.bf16.mxu0 0
      %197 = vmatpush1.bf16.msra.mxu0 %v156
      %198 = vmatprep.subr.bf16.mxu0 0
      %199 = vmatpush1.bf16.msra.mxu0 %v157
      %200 = vmatprep.subr.bf16.mxu0 0
      %201 = vmatpush1.bf16.msra.mxu0 %v158
      %202 = vmatprep.subr.bf16.mxu0 0
      %203 = vmatpush1.bf16.msra.mxu0 %v159
      %204 = vmatprep.subr.bf16.mxu0 0
      %205 = vmatpush1.bf16.msra.mxu0 %v160
      %206 = vmatprep.subr.bf16.mxu0 0
      %207 = vmatpush1.bf16.msra.mxu0 %v161
      %208 = vmatprep.subr.bf16.mxu0 0
      %209 = vmatpush1.bf16.msra.mxu0 %v162
      %210 = vmatprep.subr.bf16.mxu0 0
      %211 = vmatpush1.bf16.msra.mxu0 %v163
      %212 = vmatprep.mubr.bf16.mxu0 %v51
      %213 = vmatmul.mubr.bf16.gmra.mrb[0].mxu0 %v50
      %v214 = vpop.f32.mrb[0].mxu0
      %v215 = vadd.f32 0.0, %v214
      %v216 = vpop.f32.mrb[0].mxu0
      %v217 = vpop.f32.mrb[0].mxu0
      %v218 = vpop.f32.mrb[0].mxu0
      %219 = vdwg.mxu0
      %v221 = vrot.slane %v215, 7
      %222 = vrot.lane.b32.xlu0 %v221, 120
      %v223 = vpop.permute.xlu0 %222
      %vm225 = vcmask 1040384
      %v226 = vsel %vm225, 0.0, %v223
      %v227 = vsel %vm225, %v223, 0.0
      %v228 = vadd.f32 %v215, %v226
      %v229 = vadd.f32 %v227, 0.0
      %v230 = vrot.slane %v215, 6
      %231 = vrot.lane.b32.xlu0 %v230, 112
      %v232 = vpop.permute.xlu0 %231
      %vm234 = vcmask 1041408
      %v235 = vsel %vm234, 0.0, %v232
      %v236 = vsel %vm234, %v232, 0.0
      %v237 = vadd.f32 %v228, %v235
      %v238 = vadd.f32 %v229, %v236
      %v239 = vrot.slane %v215, 5
      %240 = vrot.lane.b32.xlu0 %v239, 104
      %v241 = vpop.permute.xlu0 %240
      %vm243 = vcmask 1042432
      %v244 = vsel %vm243, 0.0, %v241
      %v245 = vadd.f32 %v237, %v244
      %v246 = vadd.f32 %v238, %v241
      %v247 = vld [vmem:[%s4] sm:$0xff]
      %v248 = vld [vmem:[%s4 + $0x8] sm:$0x7]
      %v249 = vmul.f32 %v245, %v247
      %v250 = vmul.f32 %v246, %v248
      %v251 = vld [vmem:[%s5] sm:$0x3]
      %vm252 = vcmask 39936
      %v254 = vsel %vm252, %v251, 0
      %vm256 = vcmask 1044480
      %v258 = vsel %vm256, %v249, 0
      %260 = vmatprep.subr.mxu0 0.0
      %261 = vmatpush1.msra.mxu0 %v258
      %262 = vmatprep.subr.mxu0 0.0
      %263 = vmatpush1.msra.mxu0 0.0
      %264 = vmatprep.subr.mxu0 0.0
      %265 = vmatpush1.msra.mxu0 0.0
      %266 = vmatprep.subr.mxu0 0.0
      %267 = vmatpush1.msra.mxu0 0.0
      %268 = vmatprep.subr.mxu0 0.0
      %269 = vmatpush1.msra.mxu0 0.0
      %270 = vmatprep.subr.mxu0 0.0
      %271 = vmatpush1.msra.mxu0 0.0
      %272 = vmatprep.subr.mxu0 0.0
      %273 = vmatpush1.msra.mxu0 0.0
      %274 = vmatprep.subr.mxu0 0.0
      %275 = vmatpush1.msra.mxu0 0.0
      %276 = vmatprep.subr.mxu0 0.0
      %277 = vmatpush1.msra.mxu0 0.0
      %278 = vmatprep.subr.mxu0 0.0
      %279 = vmatpush1.msra.mxu0 0.0
      %280 = vmatprep.subr.mxu0 0.0
      %281 = vmatpush1.msra.mxu0 0.0
      %282 = vmatprep.subr.mxu0 0.0
      %283 = vmatpush1.msra.mxu0 0.0
      %284 = vmatprep.subr.mxu0 0.0
      %285 = vmatpush1.msra.mxu0 0.0
      %286 = vmatprep.subr.mxu0 0.0
      %287 = vmatpush1.msra.mxu0 0.0
      %288 = vmatprep.subr.mxu0 0.0
      %289 = vmatpush1.msra.mxu0 0.0
      %290 = vmatprep.subr.mxu0 0.0
      %291 = vmatpush1.msra.mxu0 0.0
      %292 = vmatprep.subr.mxu0 0.0
      %293 = vmatpush1.msra.mxu0 0.0
      %294 = vmatprep.subr.mxu0 0.0
      %295 = vmatpush1.msra.mxu0 0.0
      %296 = vmatprep.subr.mxu0 0.0
      %297 = vmatpush1.msra.mxu0 0.0
      %298 = vmatprep.subr.mxu0 0.0
      %299 = vmatpush1.msra.mxu0 0.0
      %300 = vmatprep.subr.mxu0 0.0
      %301 = vmatpush1.msra.mxu0 0.0
      %302 = vmatprep.subr.mxu0 0.0
      %303 = vmatpush1.msra.mxu0 0.0
      %304 = vmatprep.subr.mxu0 0.0
      %305 = vmatpush1.msra.mxu0 0.0
      %306 = vmatprep.subr.mxu0 0.0
      %307 = vmatpush1.msra.mxu0 0.0
      %308 = vmatprep.subr.mxu0 0.0
      %309 = vmatpush1.msra.mxu0 0.0
      %310 = vmatprep.subr.mxu0 0.0
      %311 = vmatpush1.msra.mxu0 0.0
      %312 = vmatprep.subr.mxu0 0.0
      %313 = vmatpush1.msra.mxu0 0.0
      %314 = vmatprep.subr.mxu0 0.0
      %315 = vmatpush1.msra.mxu0 0.0
      %316 = vmatprep.subr.mxu0 0.0
      %317 = vmatpush1.msra.mxu0 0.0
      %318 = vmatprep.subr.mxu0 0.0
      %319 = vmatpush1.msra.mxu0 0.0
      %320 = vmatprep.subr.mxu0 0.0
      %321 = vmatpush1.msra.mxu0 0.0
      %322 = vmatprep.subr.mxu0 0.0
      %323 = vmatpush1.msra.mxu0 0.0
      %324 = vmatprep.mubr.f32.mxu0 0.0
      %325 = vmatmul.mubr.f32.gmra.mrb[0].mxu0 %v254
      %v326 = vpop.f32.mrb[0].mxu0
      %v327 = vadd.f32 0.0, %v326
      %v328 = vpop.f32.mrb[0].mxu0
      %329 = vdwg.mxu0
      %v330 = vld [vmem:[%s6] sm:$0xff]
      %s331 = scalar_lea.vmem %s5, 2
      %v332 = vld [vmem:[%s331] sm:$0x3]
      %v334 = vsel %vm252, %v332, 0
      %336 = vmatprep.subr.mxu0 0.0
      %337 = vmatpush1.msra.mxu0 %v258
      %338 = vmatprep.subr.mxu0 0.0
      %339 = vmatpush1.msra.mxu0 0.0
      %340 = vmatprep.subr.mxu0 0.0
      %341 = vmatpush1.msra.mxu0 0.0
      %342 = vmatprep.subr.mxu0 0.0
      %343 = vmatpush1.msra.mxu0 0.0
      %344 = vmatprep.subr.mxu0 0.0
      %345 = vmatpush1.msra.mxu0 0.0
      %346 = vmatprep.subr.mxu0 0.0
      %347 = vmatpush1.msra.mxu0 0.0
      %348 = vmatprep.subr.mxu0 0.0
      %349 = vmatpush1.msra.mxu0 0.0
      %350 = vmatprep.subr.mxu0 0.0
      %351 = vmatpush1.msra.mxu0 0.0
      %352 = vmatprep.subr.mxu0 0.0
      %353 = vmatpush1.msra.mxu0 0.0
      %354 = vmatprep.subr.mxu0 0.0
      %355 = vmatpush1.msra.mxu0 0.0
      %356 = vmatprep.subr.mxu0 0.0
      %357 = vmatpush1.msra.mxu0 0.0
      %358 = vmatprep.subr.mxu0 0.0
      %359 = vmatpush1.msra.mxu0 0.0
      %360 = vmatprep.subr.mxu0 0.0
      %361 = vmatpush1.msra.mxu0 0.0
      %362 = vmatprep.subr.mxu0 0.0
      %363 = vmatpush1.msra.mxu0 0.0
      %364 = vmatprep.subr.mxu0 0.0
      %365 = vmatpush1.msra.mxu0 0.0
      %366 = vmatprep.subr.mxu0 0.0
      %367 = vmatpush1.msra.mxu0 0.0
      %368 = vmatprep.subr.mxu0 0.0
      %369 = vmatpush1.msra.mxu0 0.0
      %370 = vmatprep.subr.mxu0 0.0
      %371 = vmatpush1.msra.mxu0 0.0
      %372 = vmatprep.subr.mxu0 0.0
      %373 = vmatpush1.msra.mxu0 0.0
      %374 = vmatprep.subr.mxu0 0.0
      %375 = vmatpush1.msra.mxu0 0.0
      %376 = vmatprep.subr.mxu0 0.0
      %377 = vmatpush1.msra.mxu0 0.0
      %378 = vmatprep.subr.mxu0 0.0
      %379 = vmatpush1.msra.mxu0 0.0
      %380 = vmatprep.subr.mxu0 0.0
      %381 = vmatpush1.msra.mxu0 0.0
      %382 = vmatprep.subr.mxu0 0.0
      %383 = vmatpush1.msra.mxu0 0.0
      %384 = vmatprep.subr.mxu0 0.0
      %385 = vmatpush1.msra.mxu0 0.0
      %386 = vmatprep.subr.mxu0 0.0
      %387 = vmatpush1.msra.mxu0 0.0
      %388 = vmatprep.subr.mxu0 0.0
      %389 = vmatpush1.msra.mxu0 0.0
      %390 = vmatprep.subr.mxu0 0.0
      %391 = vmatpush1.msra.mxu0 0.0
      %392 = vmatprep.subr.mxu0 0.0
      %393 = vmatpush1.msra.mxu0 0.0
      %394 = vmatprep.subr.mxu0 0.0
      %395 = vmatpush1.msra.mxu0 0.0
      %396 = vmatprep.subr.mxu0 0.0
      %397 = vmatpush1.msra.mxu0 0.0
      %398 = vmatprep.subr.mxu0 0.0
      %399 = vmatpush1.msra.mxu0 0.0
      %400 = vmatprep.mubr.f32.mxu0 0.0
      %401 = vmatmul.mubr.f32.gmra.mrb[0].mxu0 %v334
      %v402 = vpop.f32.mrb[0].mxu0
      %v403 = vadd.f32 0.0, %v402
      %v404 = vpop.f32.mrb[0].mxu0
      %405 = vdwg.mxu0
      %s406 = scalar_lea.vmem %s6, 8
      %v407 = vld [vmem:[%s406] sm:$0xff]
      %vm408 = vcmask 64512
      %v410 = vsel %vm408, %v403, 0
      %412 = vmatprep.subr.mxu0 0.0
      %413 = vmatpush1.msra.mxu0 %v407
      %414 = vmatprep.subr.mxu0 0.0
      %415 = vmatpush1.msra.mxu0 0.0
      %416 = vmatprep.subr.mxu0 0.0
      %417 = vmatpush1.msra.mxu0 0.0
      %418 = vmatprep.subr.mxu0 0.0
      %419 = vmatpush1.msra.mxu0 0.0
      %420 = vmatprep.subr.mxu0 0.0
      %421 = vmatpush1.msra.mxu0 0.0
      %422 = vmatprep.subr.mxu0 0.0
      %423 = vmatpush1.msra.mxu0 0.0
      %424 = vmatprep.subr.mxu0 0.0
      %425 = vmatpush1.msra.mxu0 0.0
      %426 = vmatprep.subr.mxu0 0.0
      %427 = vmatpush1.msra.mxu0 0.0
      %428 = vmatprep.subr.mxu0 0.0
      %429 = vmatpush1.msra.mxu0 0.0
      %430 = vmatprep.subr.mxu0 0.0
      %431 = vmatpush1.msra.mxu0 0.0
      %432 = vmatprep.subr.mxu0 0.0
      %433 = vmatpush1.msra.mxu0 0.0
      %434 = vmatprep.subr.mxu0 0.0
      %435 = vmatpush1.msra.mxu0 0.0
      %436 = vmatprep.subr.mxu0 0.0
      %437 = vmatpush1.msra.mxu0 0.0
      %438 = vmatprep.subr.mxu0 0.0
      %439 = vmatpush1.msra.mxu0 0.0
      %440 = vmatprep.subr.mxu0 0.0
      %441 = vmatpush1.msra.mxu0 0.0
      %442 = vmatprep.subr.mxu0 0.0
      %443 = vmatpush1.msra.mxu0 0.0
      %444 = vmatprep.subr.mxu0 0.0
      %445 = vmatpush1.msra.mxu0 0.0
      %446 = vmatprep.subr.mxu0 0.0
      %447 = vmatpush1.msra.mxu0 0.0
      %448 = vmatprep.subr.mxu0 0.0
      %449 = vmatpush1.msra.mxu0 0.0
      %450 = vmatprep.subr.mxu0 0.0
      %451 = vmatpush1.msra.mxu0 0.0
      %452 = vmatprep.subr.mxu0 0.0
      %453 = vmatpush1.msra.mxu0 0.0
      %454 = vmatprep.subr.mxu0 0.0
      %455 = vmatpush1.msra.mxu0 0.0
      %456 = vmatprep.subr.mxu0 0.0
      %457 = vmatpush1.msra.mxu0 0.0
      %458 = vmatprep.subr.mxu0 0.0
      %459 = vmatpush1.msra.mxu0 0.0
      %460 = vmatprep.subr.mxu0 0.0
      %461 = vmatpush1.msra.mxu0 0.0
      %462 = vmatprep.subr.mxu0 0.0
      %463 = vmatpush1.msra.mxu0 0.0
      %464 = vmatprep.subr.mxu0 0.0
      %465 = vmatpush1.msra.mxu0 0.0
      %466 = vmatprep.subr.mxu0 0.0
      %467 = vmatpush1.msra.mxu0 0.0
      %468 = vmatprep.subr.mxu0 0.0
      %469 = vmatpush1.msra.mxu0 0.0
      %470 = vmatprep.subr.mxu0 0.0
      %471 = vmatpush1.msra.mxu0 0.0
      %472 = vmatprep.subr.mxu0 0.0
      %473 = vmatpush1.msra.mxu0 0.0
      %474 = vmatprep.subr.mxu0 0.0
      %475 = vmatpush1.msra.mxu0 0.0
      %476 = vmatprep.mubr.f32.mxu0 0.0
      %477 = vmatmul.mubr.f32.gmra.mrb[0].mxu0 %v410
      %v478 = vpop.f32.mrb[0].mxu0
      %v479 = vadd.f32 0.0, %v478
      %v480 = vpop.f32.mrb[0].mxu0
      %481 = vdwg.mxu0
      %v483 = vsel %vm408, %v327, 0
      %485 = vmatprep.subr.mxu0 0.0
      %486 = vmatpush1.msra.mxu0 %v330
      %487 = vmatprep.subr.mxu0 0.0
      %488 = vmatpush1.msra.mxu0 0.0
      %489 = vmatprep.subr.mxu0 0.0
      %490 = vmatpush1.msra.mxu0 0.0
      %491 = vmatprep.subr.mxu0 0.0
      %492 = vmatpush1.msra.mxu0 0.0
      %493 = vmatprep.subr.mxu0 0.0
      %494 = vmatpush1.msra.mxu0 0.0
      %495 = vmatprep.subr.mxu0 0.0
      %496 = vmatpush1.msra.mxu0 0.0
      %497 = vmatprep.subr.mxu0 0.0
      %498 = vmatpush1.msra.mxu0 0.0
      %499 = vmatprep.subr.mxu0 0.0
      %500 = vmatpush1.msra.mxu0 0.0
      %501 = vmatprep.subr.mxu0 0.0
      %502 = vmatpush1.msra.mxu0 0.0
      %503 = vmatprep.subr.mxu0 0.0
      %504 = vmatpush1.msra.mxu0 0.0
      %505 = vmatprep.subr.mxu0 0.0
      %506 = vmatpush1.msra.mxu0 0.0
      %507 = vmatprep.subr.mxu0 0.0
      %508 = vmatpush1.msra.mxu0 0.0
      %509 = vmatprep.subr.mxu0 0.0
      %510 = vmatpush1.msra.mxu0 0.0
      %511 = vmatprep.subr.mxu0 0.0
      %512 = vmatpush1.msra.mxu0 0.0
      %513 = vmatprep.subr.mxu0 0.0
      %514 = vmatpush1.msra.mxu0 0.0
      %515 = vmatprep.subr.mxu0 0.0
      %516 = vmatpush1.msra.mxu0 0.0
      %517 = vmatprep.subr.mxu0 0.0
      %518 = vmatpush1.msra.mxu0 0.0
      %519 = vmatprep.subr.mxu0 0.0
      %520 = vmatpush1.msra.mxu0 0.0
      %521 = vmatprep.subr.mxu0 0.0
      %522 = vmatpush1.msra.mxu0 0.0
      %523 = vmatprep.subr.mxu0 0.0
      %524 = vmatpush1.msra.mxu0 0.0
      %525 = vmatprep.subr.mxu0 0.0
      %526 = vmatpush1.msra.mxu0 0.0
      %527 = vmatprep.subr.mxu0 0.0
      %528 = vmatpush1.msra.mxu0 0.0
      %529 = vmatprep.subr.mxu0 0.0
      %530 = vmatpush1.msra.mxu0 0.0
      %531 = vmatprep.subr.mxu0 0.0
      %532 = vmatpush1.msra.mxu0 0.0
      %533 = vmatprep.subr.mxu0 0.0
      %534 = vmatpush1.msra.mxu0 0.0
      %535 = vmatprep.subr.mxu0 0.0
      %536 = vmatpush1.msra.mxu0 0.0
      %537 = vmatprep.subr.mxu0 0.0
      %538 = vmatpush1.msra.mxu0 0.0
      %539 = vmatprep.subr.mxu0 0.0
      %540 = vmatpush1.msra.mxu0 0.0
      %541 = vmatprep.subr.mxu0 0.0
      %542 = vmatpush1.msra.mxu0 0.0
      %543 = vmatprep.subr.mxu0 0.0
      %544 = vmatpush1.msra.mxu0 0.0
      %545 = vmatprep.subr.mxu0 0.0
      %546 = vmatpush1.msra.mxu0 0.0
      %547 = vmatprep.subr.mxu0 0.0
      %548 = vmatpush1.msra.mxu0 0.0
      %549 = vmatprep.mubr.f32.mxu0 0.0
      %550 = vmatmul.mubr.f32.gmra.mrb[0].mxu0 %v483
      %v551 = vpop.f32.mrb[0].mxu0
      %v552 = vadd.f32 %v479, %v551
      %v553 = vpop.f32.mrb[0].mxu0
      %554 = vdwg.mxu0
      %s555 = scalar_lea.vmem %s5, 4
      %v556 = vld [vmem:[%s555] sm:$0x3]
      %v558 = vrot.slane %v249, 6
      %v559 = vrot.slane %v250, 6
      %v560 = vsel %vm234, %v558, %v559
      %v562 = vsel %vm252, %v556, 0
      %v564 = vsel %vm256, %v560, 0
      %566 = vmatprep.subr.mxu0 0.0
      %567 = vmatpush1.msra.mxu0 %v564
      %568 = vmatprep.subr.mxu0 0.0
      %569 = vmatpush1.msra.mxu0 0.0
      %570 = vmatprep.subr.mxu0 0.0
      %571 = vmatpush1.msra.mxu0 0.0
      %572 = vmatprep.subr.mxu0 0.0
      %573 = vmatpush1.msra.mxu0 0.0
      %574 = vmatprep.subr.mxu0 0.0
      %575 = vmatpush1.msra.mxu0 0.0
      %576 = vmatprep.subr.mxu0 0.0
      %577 = vmatpush1.msra.mxu0 0.0
      %578 = vmatprep.subr.mxu0 0.0
      %579 = vmatpush1.msra.mxu0 0.0
      %580 = vmatprep.subr.mxu0 0.0
      %581 = vmatpush1.msra.mxu0 0.0
      %582 = vmatprep.subr.mxu0 0.0
      %583 = vmatpush1.msra.mxu0 0.0
      %584 = vmatprep.subr.mxu0 0.0
      %585 = vmatpush1.msra.mxu0 0.0
      %586 = vmatprep.subr.mxu0 0.0
      %587 = vmatpush1.msra.mxu0 0.0
      %588 = vmatprep.subr.mxu0 0.0
      %589 = vmatpush1.msra.mxu0 0.0
      %590 = vmatprep.subr.mxu0 0.0
      %591 = vmatpush1.msra.mxu0 0.0
      %592 = vmatprep.subr.mxu0 0.0
      %593 = vmatpush1.msra.mxu0 0.0
      %594 = vmatprep.subr.mxu0 0.0
      %595 = vmatpush1.msra.mxu0 0.0
      %596 = vmatprep.subr.mxu0 0.0
      %597 = vmatpush1.msra.mxu0 0.0
      %598 = vmatprep.subr.mxu0 0.0
      %599 = vmatpush1.msra.mxu0 0.0
      %600 = vmatprep.subr.mxu0 0.0
      %601 = vmatpush1.msra.mxu0 0.0
      %602 = vmatprep.subr.mxu0 0.0
      %603 = vmatpush1.msra.mxu0 0.0
      %604 = vmatprep.subr.mxu0 0.0
      %605 = vmatpush1.msra.mxu0 0.0
      %606 = vmatprep.subr.mxu0 0.0
      %607 = vmatpush1.msra.mxu0 0.0
      %608 = vmatprep.subr.mxu0 0.0
      %609 = vmatpush1.msra.mxu0 0.0
      %610 = vmatprep.subr.mxu0 0.0
      %611 = vmatpush1.msra.mxu0 0.0
      %612 = vmatprep.subr.mxu0 0.0
      %613 = vmatpush1.msra.mxu0 0.0
      %614 = vmatprep.subr.mxu0 0.0
      %615 = vmatpush1.msra.mxu0 0.0
      %616 = vmatprep.subr.mxu0 0.0
      %617 = vmatpush1.msra.mxu0 0.0
      %618 = vmatprep.subr.mxu0 0.0
      %619 = vmatpush1.msra.mxu0 0.0
      %620 = vmatprep.subr.mxu0 0.0
      %621 = vmatpush1.msra.mxu0 0.0
      %622 = vmatprep.subr.mxu0 0.0
      %623 = vmatpush1.msra.mxu0 0.0
      %624 = vmatprep.subr.mxu0 0.0
      %625 = vmatpush1.msra.mxu0 0.0
      %626 = vmatprep.subr.mxu0 0.0
      %627 = vmatpush1.msra.mxu0 0.0
      %628 = vmatprep.subr.mxu0 0.0
      %629 = vmatpush1.msra.mxu0 0.0
      %630 = vmatprep.mubr.f32.mxu0 0.0
      %631 = vmatmul.mubr.f32.gmra.mrb[0].mxu0 %v562
      %v632 = vpop.f32.mrb[0].mxu0
      %v633 = vadd.f32 0.0, %v632
      %v634 = vpop.f32.mrb[0].mxu0
      %635 = vdwg.mxu0
      %s636 = scalar_lea.vmem %s6, 16
      %v637 = vld [vmem:[%s636] sm:$0xff]
      %s638 = scalar_lea.vmem %s5, 6
      %v639 = vld [vmem:[%s638] sm:$0x3]
      %v641 = vsel %vm252, %v639, 0
      %643 = vmatprep.subr.mxu0 0.0
      %644 = vmatpush1.msra.mxu0 %v564
      %645 = vmatprep.subr.mxu0 0.0
      %646 = vmatpush1.msra.mxu0 0.0
      %647 = vmatprep.subr.mxu0 0.0
      %648 = vmatpush1.msra.mxu0 0.0
      %649 = vmatprep.subr.mxu0 0.0
      %650 = vmatpush1.msra.mxu0 0.0
      %651 = vmatprep.subr.mxu0 0.0
      %652 = vmatpush1.msra.mxu0 0.0
      %653 = vmatprep.subr.mxu0 0.0
      %654 = vmatpush1.msra.mxu0 0.0
      %655 = vmatprep.subr.mxu0 0.0
      %656 = vmatpush1.msra.mxu0 0.0
      %657 = vmatprep.subr.mxu0 0.0
      %658 = vmatpush1.msra.mxu0 0.0
      %659 = vmatprep.subr.mxu0 0.0
      %660 = vmatpush1.msra.mxu0 0.0
      %661 = vmatprep.subr.mxu0 0.0
      %662 = vmatpush1.msra.mxu0 0.0
      %663 = vmatprep.subr.mxu0 0.0
      %664 = vmatpush1.msra.mxu0 0.0
      %665 = vmatprep.subr.mxu0 0.0
      %666 = vmatpush1.msra.mxu0 0.0
      %667 = vmatprep.subr.mxu0 0.0
      %668 = vmatpush1.msra.mxu0 0.0
      %669 = vmatprep.subr.mxu0 0.0
      %670 = vmatpush1.msra.mxu0 0.0
      %671 = vmatprep.subr.mxu0 0.0
      %672 = vmatpush1.msra.mxu0 0.0
      %673 = vmatprep.subr.mxu0 0.0
      %674 = vmatpush1.msra.mxu0 0.0
      %675 = vmatprep.subr.mxu0 0.0
      %676 = vmatpush1.msra.mxu0 0.0
      %677 = vmatprep.subr.mxu0 0.0
      %678 = vmatpush1.msra.mxu0 0.0
      %679 = vmatprep.subr.mxu0 0.0
      %680 = vmatpush1.msra.mxu0 0.0
      %681 = vmatprep.subr.mxu0 0.0
      %682 = vmatpush1.msra.mxu0 0.0
      %683 = vmatprep.subr.mxu0 0.0
      %684 = vmatpush1.msra.mxu0 0.0
      %685 = vmatprep.subr.mxu0 0.0
      %686 = vmatpush1.msra.mxu0 0.0
      %687 = vmatprep.subr.mxu0 0.0
      %688 = vmatpush1.msra.mxu0 0.0
      %689 = vmatprep.subr.mxu0 0.0
      %690 = vmatpush1.msra.mxu0 0.0
      %691 = vmatprep.subr.mxu0 0.0
      %692 = vmatpush1.msra.mxu0 0.0
      %693 = vmatprep.subr.mxu0 0.0
      %694 = vmatpush1.msra.mxu0 0.0
      %695 = vmatprep.subr.mxu0 0.0
      %696 = vmatpush1.msra.mxu0 0.0
      %697 = vmatprep.subr.mxu0 0.0
      %698 = vmatpush1.msra.mxu0 0.0
      %699 = vmatprep.subr.mxu0 0.0
      %700 = vmatpush1.msra.mxu0 0.0
      %701 = vmatprep.subr.mxu0 0.0
      %702 = vmatpush1.msra.mxu0 0.0
      %703 = vmatprep.subr.mxu0 0.0
      %704 = vmatpush1.msra.mxu0 0.0
      %705 = vmatprep.subr.mxu0 0.0
      %706 = vmatpush1.msra.mxu0 0.0
      %707 = vmatprep.mubr.f32.mxu0 0.0
      %708 = vmatmul.mubr.f32.gmra.mrb[0].mxu0 %v641
      %v709 = vpop.f32.mrb[0].mxu0
      %v710 = vadd.f32 0.0, %v709
      %v711 = vpop.f32.mrb[0].mxu0
      %712 = vdwg.mxu0
      %s713 = scalar_lea.vmem %s6, 24
      %v714 = vld [vmem:[%s713] sm:$0xff]
      %v716 = vsel %vm408, %v710, 0
      %718 = vmatprep.subr.mxu0 0.0
      %719 = vmatpush1.msra.mxu0 %v714
      %720 = vmatprep.subr.mxu0 0.0
      %721 = vmatpush1.msra.mxu0 0.0
      %722 = vmatprep.subr.mxu0 0.0
      %723 = vmatpush1.msra.mxu0 0.0
      %724 = vmatprep.subr.mxu0 0.0
      %725 = vmatpush1.msra.mxu0 0.0
      %726 = vmatprep.subr.mxu0 0.0
      %727 = vmatpush1.msra.mxu0 0.0
      %728 = vmatprep.subr.mxu0 0.0
      %729 = vmatpush1.msra.mxu0 0.0
      %730 = vmatprep.subr.mxu0 0.0
      %731 = vmatpush1.msra.mxu0 0.0
      %732 = vmatprep.subr.mxu0 0.0
      %733 = vmatpush1.msra.mxu0 0.0
      %734 = vmatprep.subr.mxu0 0.0
      %735 = vmatpush1.msra.mxu0 0.0
      %736 = vmatprep.subr.mxu0 0.0
      %737 = vmatpush1.msra.mxu0 0.0
      %738 = vmatprep.subr.mxu0 0.0
      %739 = vmatpush1.msra.mxu0 0.0
      %740 = vmatprep.subr.mxu0 0.0
      %741 = vmatpush1.msra.mxu0 0.0
      %742 = vmatprep.subr.mxu0 0.0
      %743 = vmatpush1.msra.mxu0 0.0
      %744 = vmatprep.subr.mxu0 0.0
      %745 = vmatpush1.msra.mxu0 0.0
      %746 = vmatprep.subr.mxu0 0.0
      %747 = vmatpush1.msra.mxu0 0.0
      %748 = vmatprep.subr.mxu0 0.0
      %749 = vmatpush1.msra.mxu0 0.0
      %750 = vmatprep.subr.mxu0 0.0
      %751 = vmatpush1.msra.mxu0 0.0
      %752 = vmatprep.subr.mxu0 0.0
      %753 = vmatpush1.msra.mxu0 0.0
      %754 = vmatprep.subr.mxu0 0.0
      %755 = vmatpush1.msra.mxu0 0.0
      %756 = vmatprep.subr.mxu0 0.0
      %757 = vmatpush1.msra.mxu0 0.0
      %758 = vmatprep.subr.mxu0 0.0
      %759 = vmatpush1.msra.mxu0 0.0
      %760 = vmatprep.subr.mxu0 0.0
      %761 = vmatpush1.msra.mxu0 0.0
      %762 = vmatprep.subr.mxu0 0.0
      %763 = vmatpush1.msra.mxu0 0.0
      %764 = vmatprep.subr.mxu0 0.0
      %765 = vmatpush1.msra.mxu0 0.0
      %766 = vmatprep.subr.mxu0 0.0
      %767 = vmatpush1.msra.mxu0 0.0
      %768 = vmatprep.subr.mxu0 0.0
      %769 = vmatpush1.msra.mxu0 0.0
      %770 = vmatprep.subr.mxu0 0.0
      %771 = vmatpush1.msra.mxu0 0.0
      %772 = vmatprep.subr.mxu0 0.0
      %773 = vmatpush1.msra.mxu0 0.0
      %774 = vmatprep.subr.mxu0 0.0
      %775 = vmatpush1.msra.mxu0 0.0
      %776 = vmatprep.subr.mxu0 0.0
      %777 = vmatpush1.msra.mxu0 0.0
      %778 = vmatprep.subr.mxu0 0.0
      %779 = vmatpush1.msra.mxu0 0.0
      %780 = vmatprep.subr.mxu0 0.0
      %781 = vmatpush1.msra.mxu0 0.0
      %782 = vmatprep.mubr.f32.mxu0 0.0
      %783 = vmatmul.mubr.f32.gmra.mrb[0].mxu0 %v716
      %v784 = vpop.f32.mrb[0].mxu0
      %v785 = vadd.f32 0.0, %v784
      %v786 = vpop.f32.mrb[0].mxu0
      %787 = vdwg.mxu0
      %v789 = vsel %vm408, %v633, 0
      %791 = vmatprep.subr.mxu0 0.0
      %792 = vmatpush1.msra.mxu0 %v637
      %793 = vmatprep.subr.mxu0 0.0
      %794 = vmatpush1.msra.mxu0 0.0
      %795 = vmatprep.subr.mxu0 0.0
      %796 = vmatpush1.msra.mxu0 0.0
      %797 = vmatprep.subr.mxu0 0.0
      %798 = vmatpush1.msra.mxu0 0.0
      %799 = vmatprep.subr.mxu0 0.0
      %800 = vmatpush1.msra.mxu0 0.0
      %801 = vmatprep.subr.mxu0 0.0
      %802 = vmatpush1.msra.mxu0 0.0
      %803 = vmatprep.subr.mxu0 0.0
      %804 = vmatpush1.msra.mxu0 0.0
      %805 = vmatprep.subr.mxu0 0.0
      %806 = vmatpush1.msra.mxu0 0.0
      %807 = vmatprep.subr.mxu0 0.0
      %808 = vmatpush1.msra.mxu0 0.0
      %809 = vmatprep.subr.mxu0 0.0
      %810 = vmatpush1.msra.mxu0 0.0
      %811 = vmatprep.subr.mxu0 0.0
      %812 = vmatpush1.msra.mxu0 0.0
      %813 = vmatprep.subr.mxu0 0.0
      %814 = vmatpush1.msra.mxu0 0.0
      %815 = vmatprep.subr.mxu0 0.0
      %816 = vmatpush1.msra.mxu0 0.0
      %817 = vmatprep.subr.mxu0 0.0
      %818 = vmatpush1.msra.mxu0 0.0
      %819 = vmatprep.subr.mxu0 0.0
      %820 = vmatpush1.msra.mxu0 0.0
      %821 = vmatprep.subr.mxu0 0.0
      %822 = vmatpush1.msra.mxu0 0.0
      %823 = vmatprep.subr.mxu0 0.0
      %824 = vmatpush1.msra.mxu0 0.0
      %825 = vmatprep.subr.mxu0 0.0
      %826 = vmatpush1.msra.mxu0 0.0
      %827 = vmatprep.subr.mxu0 0.0
      %828 = vmatpush1.msra.mxu0 0.0
      %829 = vmatprep.subr.mxu0 0.0
      %830 = vmatpush1.msra.mxu0 0.0
      %831 = vmatprep.subr.mxu0 0.0
      %832 = vmatpush1.msra.mxu0 0.0
      %833 = vmatprep.subr.mxu0 0.0
      %834 = vmatpush1.msra.mxu0 0.0
      %835 = vmatprep.subr.mxu0 0.0
      %836 = vmatpush1.msra.mxu0 0.0
      %837 = vmatprep.subr.mxu0 0.0
      %838 = vmatpush1.msra.mxu0 0.0
      %839 = vmatprep.subr.mxu0 0.0
      %840 = vmatpush1.msra.mxu0 0.0
      %841 = vmatprep.subr.mxu0 0.0
      %842 = vmatpush1.msra.mxu0 0.0
      %843 = vmatprep.subr.mxu0 0.0
      %844 = vmatpush1.msra.mxu0 0.0
      %845 = vmatprep.subr.mxu0 0.0
      %846 = vmatpush1.msra.mxu0 0.0
      %847 = vmatprep.subr.mxu0 0.0
      %848 = vmatpush1.msra.mxu0 0.0
      %849 = vmatprep.subr.mxu0 0.0
      %850 = vmatpush1.msra.mxu0 0.0
      %851 = vmatprep.subr.mxu0 0.0
      %852 = vmatpush1.msra.mxu0 0.0
      %853 = vmatprep.subr.mxu0 0.0
      %854 = vmatpush1.msra.mxu0 0.0
      %855 = vmatprep.mubr.f32.mxu0 0.0
      %856 = vmatmul.mubr.f32.gmra.mrb[0].mxu0 %v789
      %v857 = vpop.f32.mrb[0].mxu0
      %v858 = vadd.f32 %v785, %v857
      %v859 = vpop.f32.mrb[0].mxu0
      %860 = vdwg.mxu0
      %v862 = vrot.slane %v858, 7
      %v864 = vsel %vm234, %v552, %v249
      %v865 = vsel %vm225, %v250, %v862
      %vm868 = vcmask 1046528
      %v869 = vrot.slane %v864, 1
      %v870 = vrot.slane %v865, 1
      %v871 = vsel %vm868, %v869, %v870
      %872 = vrot.lane.b32.xlu0 %v871, 8
      %v873 = vpop.permute.xlu0 %872
      %vm875 = vcmask 1045504
      %v876 = vrot.slane %v864, 2
      %v877 = vrot.slane %v865, 2
      %v878 = vsel %vm875, %v876, %v877
      %879 = vrot.lane.b32.xlu0 %v878, 16
      %v880 = vpop.permute.xlu0 %879
      %v882 = vrot.slane %v864, 3
      %v883 = vrot.slane %v865, 3
      %v884 = vsel %vm256, %v882, %v883
      %885 = vrot.lane.b32.xlu0 %v884, 24
      %v886 = vpop.permute.xlu0 %885
      %v888 = vsel %vm408, %v864, %v873
      %vm889 = vcmask 130048
      %v890 = vsel %vm889, %v888, %v880
      %vm891 = vcmask 195584
      %v892 = vsel %vm891, %v890, %v886
      %v893 = vpack.c.bf16 %v892, %v892
      %v894 = vld [vmem:[%s3] sm:$0xff]
      %v895 = vld [vmem:[%s3 + $0x8] sm:$0xff]
      %v896 = vld [vmem:[%s3 + $0x10] sm:$0xff]
      %v897 = vld [vmem:[%s3 + $0x18] sm:$0xff]
      %v902 = vunpack.c.l.b16 %v894
      %v903 = vunpack.c.h.b16 %v894
      %v904 = vunpack.c.l.b16 %v895
      %v905 = vunpack.c.h.b16 %v895
      %v906 = vunpack.c.l.b16 %v896
      %v907 = vunpack.c.h.b16 %v896
      %v908 = vunpack.c.l.b16 %v897
      %v909 = vunpack.c.h.b16 %v897
      %v910 = vpack.c.b16 %v904, %v902
      %v911 = vpack.c.b16 %v905, %v903
      %v912 = vpack.c.b16 %v908, %v906
      %v913 = vpack.c.b16 %v909, %v907
      %vm918 = vcmask 261120
      %v920 = vsel %vm918, %v893, 0
      %922 = vmatprep.subr.bf16.mxu0 %v911
      %923 = vmatpush1.bf16.msra.mxu0 %v910
      %924 = vmatprep.subr.bf16.mxu0 %v913
      %925 = vmatpush1.bf16.msra.mxu0 %v912
      %926 = vmatprep.subr.bf16.mxu0 0
      %927 = vmatpush1.bf16.msra.mxu0 0
      %928 = vmatprep.subr.bf16.mxu0 0
      %929 = vmatpush1.bf16.msra.mxu0 0
      %930 = vmatprep.subr.bf16.mxu0 0
      %931 = vmatpush1.bf16.msra.mxu0 0
      %932 = vmatprep.subr.bf16.mxu0 0
      %933 = vmatpush1.bf16.msra.mxu0 0
      %934 = vmatprep.subr.bf16.mxu0 0
      %935 = vmatpush1.bf16.msra.mxu0 0
      %936 = vmatprep.subr.bf16.mxu0 0
      %937 = vmatpush1.bf16.msra.mxu0 0
      %938 = vmatprep.subr.bf16.mxu0 0
      %939 = vmatpush1.bf16.msra.mxu0 0
      %940 = vmatprep.subr.bf16.mxu0 0
      %941 = vmatpush1.bf16.msra.mxu0 0
      %942 = vmatprep.subr.bf16.mxu0 0
      %943 = vmatpush1.bf16.msra.mxu0 0
      %944 = vmatprep.subr.bf16.mxu0 0
      %945 = vmatpush1.bf16.msra.mxu0 0
      %946 = vmatprep.subr.bf16.mxu0 0
      %947 = vmatpush1.bf16.msra.mxu0 0
      %948 = vmatprep.subr.bf16.mxu0 0
      %949 = vmatpush1.bf16.msra.mxu0 0
      %950 = vmatprep.subr.bf16.mxu0 0
      %951 = vmatpush1.bf16.msra.mxu0 0
      %952 = vmatprep.subr.bf16.mxu0 0
      %953 = vmatpush1.bf16.msra.mxu0 0
      %954 = vmatprep.mubr.bf16.mxu0 0
      %955 = vmatmul.mubr.bf16.gmra.mrb[0].mxu0 %v920
      %v956 = vpop.f32.mrb[0].mxu0
      %v957 = vadd.f32 0.0, %v956
      %v958 = vpop.f32.mrb[0].mxu0
      %v959 = vadd.f32 0.0, %v958
      %v960 = vpop.f32.mrb[0].mxu0
      %v961 = vpop.f32.mrb[0].mxu0
      %962 = vdwg.mxu0
    $region34: #{tpu_custom_call.1} parent=1 // loop_footer
      %s36 = sadd.s32 1, %s32
    $region35: #{tpu_custom_call.1} parent=1 // loop_footer_branch
      %31 = sbr.rel target = $region31
    $region36: #{tpu_custom_call.1} parent=1 // loop_exit
      _
    %963 = vst [vmem:[#allocation2] sm:$0xff] %v37
    %964 = vst [vmem:[#allocation2 + $0x8] sm:$0xff] %v38
    // Predicated region
    $region37: #{tpu_custom_call.1} parent=1 // pred_check
      _
    $region38: #{tpu_custom_call.1} parent=1 // pred_check_branch
      %966 = sbr.rel (0) target = $region40
    $region39: #{tpu_custom_call.1} parent=1 // pred_region
      %s968 = ssub.s32 256, 256
      %969 = vsyncadd [#allocation3], %s968
      %s971 = sshll.u32 [#allocation2], 4
      %s972 = int_to_ptr.vmem [resolvable:$true] %s971
      %974 = dma.vmem_to_hbm [thread:$0]  %s972, 256, %s7, [#allocation3]
    $region40: #{tpu_custom_call.1} parent=1 // pred_fallthru
      _
    // Predicated region
    $region41: #{tpu_custom_call.1} parent=1 // pred_check
      _
    $region42: #{tpu_custom_call.1} parent=1 // pred_check_branch
      %976 = sbr.rel (0) target = $region44
    $region43: #{tpu_custom_call.1} parent=1 // pred_region
      %977 = dma.done [#allocation3], 256
    $region44: #{tpu_custom_call.1} parent=1 // pred_fallthru
      _
    %978 = vsyncpa [#allocation3], 1

</llo_original>
